<compile_context>
chip_gen: v5e
topology: v5e:2x2
jax: 0.10.0
libtpu: 0.0.40
codegen_flags: <defaults>
</compile_context>

<pallas_src>
import jax
import jax.numpy as jnp
from jax import lax
from jax.experimental import pallas as pl
from jax.experimental.pallas import tpu as pltpu

_HI = lax.Precision.HIGHEST  # exact-f32 matmuls (multi-pass bf16 on the MXU)


def sdpa_kernel(x1_ref, x2_ref, w_ref, b_ref, o_ref):
    # x1_ref, x2_ref : (S, F)   the two inputs; q = v = [x1 | x2]
    # w_ref          : (D, D)   linear weight, (in, out) layout, D = 2F
    # b_ref          : (1, D)   linear bias
    # o_ref          : (S, D)   output
    # Materialize q once (cheap lane concat, XLU) -- shared by the linear, the
    # attention scores and the value matmul.
    q = jnp.concatenate([x1_ref[...], x2_ref[...]], axis=-1)          # (S, D)

    # k = q @ W + b   (single MXU push)
    k = jnp.dot(q, w_ref[...], precision=_HI,
                preferred_element_type=jnp.float32) + b_ref[...]      # (S, D)

    # qk = q @ k^T  (inv_scale_factor = 1, so no scaling).  Transposed contraction
    # feeds the MXU directly -- no explicit k.T transpose.
    dn = (((1,), (1,)), ((), ()))
    qk = lax.dot_general(q, k, dn, precision=_HI,
                         preferred_element_type=jnp.float32)          # (S, S)

    # numerically-stable softmax over the last dim
    m = jnp.max(qk, axis=-1, keepdims=True)
    e = jnp.exp(qk - m)
    denom = jnp.sum(e, axis=-1, keepdims=True)
    p = e * pl.reciprocal(denom, approx=False)   # exact: keeps 1e-5 tolerance

    # dropout_p = 0 -> identity.  output = p @ v with v = q; one full-width store.
    o_ref[...] = jnp.dot(p, q, precision=_HI,
                         preferred_element_type=jnp.float32)


def model_forward(x1, x2, w, b):
    """Whole forward pass in one single-tile Pallas kernel (no grid, no HBM concat)."""
    S, F = x1.shape
    D = 2 * F
    b2 = b.reshape(1, D)

    vmem = pl.BlockSpec(memory_space=pltpu.MemorySpace.VMEM)
    out = pl.pallas_call(
        sdpa_kernel,
        out_shape=jax.ShapeDtypeStruct((S, D), jnp.float32),
        in_specs=[vmem, vmem, vmem, vmem],
        out_specs=vmem,
    )(x1, x2, w, b2)
    return out


if __name__ == "__main__":
    key = jax.random.PRNGKey(0)
    k1, k2, kw, kb = jax.random.split(key, 4)

    S = 8          # small batch of row vectors
    F_IN = 16      # each input's feature dim (matches torch.randn(1, 16))
    D = 2 * F_IN   # concatenated feature dim = 32

    x1 = jax.random.normal(k1, (S, F_IN), dtype=jnp.float32)
    x2 = jax.random.normal(k2, (S, F_IN), dtype=jnp.float32)

    # Deterministic Linear init (PyTorch-style uniform(-1/sqrt(in), 1/sqrt(in))).
    bound = 1.0 / jnp.sqrt(jnp.float32(D))
    w = jax.random.uniform(kw, (D, D), minval=-bound, maxval=bound,
                           dtype=jnp.float32)       # (in, out) layout
    b = jax.random.uniform(kb, (D,), minval=-bound, maxval=bound,
                           dtype=jnp.float32)

    out = model_forward(x1, x2, w, b)
    out = jax.block_until_ready(out)

    # Reference check in plain JAX (same math as the PyTorch forward), with the
    # same pinned precision so the comparison is exact-f32 on every generation.
    q = jnp.concatenate([x1, x2], axis=-1)
    k = jnp.dot(q, w, precision=_HI) + b
    s = jnp.dot(q, k.T, precision=_HI)
    p = jax.nn.softmax(s, axis=-1)
    ref = jnp.dot(p, q, precision=_HI)
    assert jnp.allclose(out, ref, atol=1e-5, rtol=1e-5), "mismatch vs reference"

    print("KERNEL_OK")
</pallas_src>

<mosaic_0001>
module attributes {stable_mosaic.version = 11 : i64} {
  func.func @sdpa_kernel(%arg0: memref<8x16xf32, #tpu.memory_space<vmem>>, %arg1: memref<8x16xf32, #tpu.memory_space<vmem>>, %arg2: memref<32x32xf32, #tpu.memory_space<vmem>>, %arg3: memref<1x32xf32, #tpu.memory_space<vmem>>, %arg4: memref<8x32xf32, #tpu.memory_space<vmem>>) attributes {dimension_semantics = [], scalar_prefetch = 0 : i64, scratch_operands = 0 : i64, tpu.core_type = #tpu.core_type<tc>} {
    %c0 = arith.constant 0 : index
    %c0_0 = arith.constant 0 : index
    %0 = vector.load %arg0[%c0, %c0_0] : memref<8x16xf32, #tpu.memory_space<vmem>>, vector<8x16xf32>
    %c0_1 = arith.constant 0 : index
    %c0_2 = arith.constant 0 : index
    %1 = vector.load %arg1[%c0_1, %c0_2] : memref<8x16xf32, #tpu.memory_space<vmem>>, vector<8x16xf32>
    %2 = tpu.concatenate %0, %1 in 1 : vector<8x16xf32>, vector<8x16xf32> -> vector<8x32xf32>
    %c0_3 = arith.constant 0 : index
    %c0_4 = arith.constant 0 : index
    %3 = vector.load %arg2[%c0_3, %c0_4] : memref<32x32xf32, #tpu.memory_space<vmem>>, vector<32x32xf32>
    %cst = arith.constant dense<0.000000e+00> : vector<8x32xf32>
    %4 = tpu.matmul %2, %3, %cst {dimension_numbers = #tpu.dot_dimension_numbers<[1], [0], [0], [1], [0, 0, 1, 1], [], []>, precision = #tpu.contract_precision<fp32>} : vector<8x32xf32>, vector<32x32xf32>, vector<8x32xf32> -> vector<8x32xf32>
    %c0_5 = arith.constant 0 : index
    %c0_6 = arith.constant 0 : index
    %5 = vector.load %arg3[%c0_5, %c0_6] : memref<1x32xf32, #tpu.memory_space<vmem>>, vector<1x32xf32>
    %6 = vector.broadcast %5 : vector<1x32xf32> to vector<8x32xf32>
    %7 = arith.addf %4, %6 : vector<8x32xf32>
    %cst_7 = arith.constant dense<0.000000e+00> : vector<8x8xf32>
    %8 = tpu.matmul %2, %7, %cst_7 {dimension_numbers = #tpu.dot_dimension_numbers<[1], [1], [0], [0], [0, 0, 1, 0], [], []>, precision = #tpu.contract_precision<fp32>} : vector<8x32xf32>, vector<8x32xf32>, vector<8x8xf32> -> vector<8x8xf32>
    %cst_8 = arith.constant dense<0xFF800000> : vector<8xf32>
    %9 = vector.multi_reduction <maximumf>, %8, %cst_8 [1] : vector<8x8xf32> to vector<8xf32>
    %10 = vector.shape_cast %9 : vector<8xf32> to vector<8x1xf32>
    %11 = vector.broadcast %10 : vector<8x1xf32> to vector<8x8xf32>
    %12 = arith.subf %8, %11 : vector<8x8xf32>
    %13 = math.exp %12 : vector<8x8xf32>
    %cst_9 = arith.constant dense<0.000000e+00> : vector<8xf32>
    %14 = vector.multi_reduction <add>, %13, %cst_9 [1] : vector<8x8xf32> to vector<8xf32>
    %15 = vector.shape_cast %14 : vector<8xf32> to vector<8x1xf32>
    %16 = tpu.reciprocal %15 : vector<8x1xf32> -> vector<8x1xf32>
    %17 = vector.broadcast %16 : vector<8x1xf32> to vector<8x8xf32>
    %18 = arith.mulf %13, %17 : vector<8x8xf32>
    %cst_10 = arith.constant dense<0.000000e+00> : vector<8x32xf32>
    %19 = tpu.matmul %18, %2, %cst_10 {dimension_numbers = #tpu.dot_dimension_numbers<[1], [0], [0], [1], [0, 0, 1, 1], [], []>, precision = #tpu.contract_precision<fp32>} : vector<8x8xf32>, vector<8x32xf32>, vector<8x32xf32> -> vector<8x32xf32>
    %c0_11 = arith.constant 0 : index
    %c0_12 = arith.constant 0 : index
    %20 = vector.load %arg4[%c0_11, %c0_12] : memref<8x32xf32, #tpu.memory_space<vmem>>, vector<8x32xf32>
    tpu.vector_store %arg4[%c0_11, %c0_12], %19 {strides = array<i32>} : memref<8x32xf32, #tpu.memory_space<vmem>>, vector<8x32xf32>,
    return
  }
}

</mosaic_0001>

<llo_original>
// kernel: tpu_custom_call.1
$region0: #{tpu_custom_call.1}
  #allocation0 [shape = 'u32[]', space=smem, size = 0x4, offset = 0x4, fixed_abs, tag = 'smem constant byte address 0x4 - core index']
  #allocation1 [shape = 'u32[72,128]{1,0:T(1,128)}', space=vmem, size = 0x9000, scoped, tag = 'internal scratch']
  %s0 = inlined_call_operand.hbm [shape: f32[8,16], index: 0, kind: input, shape index: {}]
  %s1 = inlined_call_operand.hbm [shape: f32[8,16], index: 1, kind: input, shape index: {}]
  %s2 = inlined_call_operand.hbm [shape: f32[32,32], index: 2, kind: input, shape index: {}]
  %s3 = inlined_call_operand.vmem [shape: f32[1,32], index: 3, kind: input, shape index: {}]
  %s4 = inlined_call_operand.hbm [shape: f32[8,32], index: 4, kind: output, shape index: {}]
  %s5 = sld [smem:[#allocation0]]
  $region38: #{tpu_custom_call.1} parent=0
    _
  %s7 = ssub.s32 1, %s5
  %s8 = scalar_select 0, %s7, %s5
  $region1: #{tpu_custom_call.1} parent=0
    #allocation2 [shape = 'u8[4096]{0}', space=vmem, size = 0x1000, scoped, tag = 'input window, operand 0, single buffered']
    #allocation3 [shape = 's32[1]{0}', space=sflag, size = 0x4, scoped, tag = 'scoped memory for tpu_custom_call.1']
    #allocation4 [shape = 's32[1]{0}', space=sflag, size = 0x4, scoped, tag = 'scoped memory for tpu_custom_call.1']
    #allocation5 [shape = 'u8[4096]{0}', space=vmem, size = 0x1000, scoped, tag = 'input window, operand 1, single buffered']
    #allocation6 [shape = 's32[1]{0}', space=sflag, size = 0x4, scoped, tag = 'scoped memory for tpu_custom_call.1']
    #allocation7 [shape = 'u8[16384]{0}', space=vmem, size = 0x4000, scoped, tag = 'input window, operand 2, single buffered']
    #allocation8 [shape = 'u8[4096]{0}', space=vmem, size = 0x1000, scoped, tag = 'output window, operand 0, single buffered']
    %9 = vsyncpa [#allocation3], 0
    %10 = vsyncpa [#allocation6], 0
    %11 = vsyncpa [#allocation4], 0
    // Predicated region
    $region2: #{tpu_custom_call.1} parent=1 // pred_check
      _
    $region3: #{tpu_custom_call.1} parent=1 // pred_check_branch
      %13 = sbr.rel (0) target = $region5
    $region4: #{tpu_custom_call.1} parent=1 // pred_region
      %15 = vsyncadd [#allocation3], 0
      %s17 = sshll.u32 %s0, 4
      %s18 = int_to_ptr.hbm [resolvable:$true] %s17
      %s19 = sshll.u32 [#allocation2], 4
      %s20 = int_to_ptr.vmem [resolvable:$true] %s19
      %22 = dma.hbm_to_vmem [thread:$0]  %s18, 128, %s20, [#allocation3]
    $region5: #{tpu_custom_call.1} parent=1 // pred_fallthru
      _
    // Predicated region
    $region6: #{tpu_custom_call.1} parent=1 // pred_check
      _
    $region7: #{tpu_custom_call.1} parent=1 // pred_check_branch
      %24 = sbr.rel (0) target = $region9
    $region8: #{tpu_custom_call.1} parent=1 // pred_region
      %26 = vsyncadd [#allocation6], 0
      %s28 = sshll.u32 %s1, 4
      %s29 = int_to_ptr.hbm [resolvable:$true] %s28
      %s30 = sshll.u32 [#allocation5], 4
      %s31 = int_to_ptr.vmem [resolvable:$true] %s30
      %33 = dma.hbm_to_vmem [thread:$0]  %s29, 128, %s31, [#allocation6]
    $region9: #{tpu_custom_call.1} parent=1 // pred_fallthru
      _
    // Predicated region
    $region10: #{tpu_custom_call.1} parent=1 // pred_check
      _
    $region11: #{tpu_custom_call.1} parent=1 // pred_check_branch
      %35 = sbr.rel (0) target = $region13
    $region12: #{tpu_custom_call.1} parent=1 // pred_region
      %37 = vsyncadd [#allocation6], 0
      %s38 = sshll.u32 %s2, 4
      %s39 = int_to_ptr.hbm [resolvable:$true] %s38
      %s40 = sshll.u32 [#allocation7], 4
      %s41 = int_to_ptr.vmem [resolvable:$true] %s40
      %46 = dma.hbm_to_vmem [thread:$0]  %s39, 512, %s41, [#allocation6], 128, 128, 8
    $region13: #{tpu_custom_call.1} parent=1 // pred_fallthru
      _
    // Predicated region
    $region14: #{tpu_custom_call.1} parent=1 // pred_check
      _
    $region15: #{tpu_custom_call.1} parent=1 // pred_check_branch
      %48 = sbr.rel (0) target = $region17
    $region16: #{tpu_custom_call.1} parent=1 // pred_region
      _
    $region17: #{tpu_custom_call.1} parent=1 // pred_fallthru
      _
    // Predicated region
    $region18: #{tpu_custom_call.1} parent=1 // pred_check
      _
    $region19: #{tpu_custom_call.1} parent=1 // pred_check_branch
      %50 = sbr.rel (0) target = $region21
    $region20: #{tpu_custom_call.1} parent=1 // pred_region
      %52 = dma.done [#allocation3], 128
    $region21: #{tpu_custom_call.1} parent=1 // pred_fallthru
      _
    // Predicated region
    $region22: #{tpu_custom_call.1} parent=1 // pred_check
      _
    $region23: #{tpu_custom_call.1} parent=1 // pred_check_branch
      %54 = sbr.rel (0) target = $region25
    $region24: #{tpu_custom_call.1} parent=1 // pred_region
      %56 = dma.done [#allocation6], 128
    $region25: #{tpu_custom_call.1} parent=1 // pred_fallthru
      _
    // Predicated region
    $region26: #{tpu_custom_call.1} parent=1 // pred_check
      _
    $region27: #{tpu_custom_call.1} parent=1 // pred_check_branch
      %58 = sbr.rel (0) target = $region29
    $region28: #{tpu_custom_call.1} parent=1 // pred_region
      %60 = dma.done [#allocation6], 512
    $region29: #{tpu_custom_call.1} parent=1 // pred_fallthru
      _
    %v61 = vld [vmem:[#allocation2] sm:$0xff]
    %v62 = vld [vmem:[#allocation5] sm:$0xff]
    %64 = vrot.lane.b32.xlu0 %v62, 16
    %v65 = vpop.permute.xlu0 %64
    %vm67 = vcmask 130048
    %v68 = vsel %vm67, %v61, %v65
    %v69 = vld [vmem:[#allocation7] sm:$0xff]
    %v70 = vld [vmem:[#allocation7 + $0x8] sm:$0xff]
    %v71 = vld [vmem:[#allocation7 + $0x10] sm:$0xff]
    %v72 = vld [vmem:[#allocation7 + $0x18] sm:$0xff]
    %v73 = vld [vmem:[%s3] sm:$0x1]
    %v75 = vperm.slane %v73, 0
    %vm77 = vcmask 261120
    %v79 = vsel %vm77, %v68, 0
    %81 = vmatpush.msra.mxu0 0.0
    %82 = vmatpush.msra.mxu0 0.0
    %83 = vmatpush.msra.mxu0 0.0
    %84 = vmatpush.msra.mxu0 0.0
    %85 = vmatpush.msra.mxu0 0.0
    %86 = vmatpush.msra.mxu0 0.0
    %87 = vmatpush.msra.mxu0 0.0
    %88 = vmatpush.msra.mxu0 0.0
    %89 = vmatpush.msra.mxu0 0.0
    %90 = vmatpush.msra.mxu0 0.0
    %91 = vmatpush.msra.mxu0 0.0
    %92 = vmatpush.msra.mxu0 0.0
    %v93 = vand.u32 %v72, 4294901760
    %94 = vmatpush.msra.mxu0 %v93
    %v95 = vand.u32 %v71, 4294901760
    %96 = vmatpush.msra.mxu0 %v95
    %v97 = vand.u32 %v70, 4294901760
    %98 = vmatpush.msra.mxu0 %v97
    %v99 = vand.u32 %v69, 4294901760
    %100 = vmatpush.msra.mxu0 %v99
    %v101 = vand.u32 %v79, 4294901760
    %v102 = vsub.f32 %v79, %v101
    %v103 = vand.u32 %v102, 4294901760
    %v104 = vsub.f32 %v102, %v103
    %v105 = vand.u32 %v104, 4294901760
    %106 = vmatmul.f32.gmra.mxu0 %v105
    %v107 = vpop.f32.mrf.mxu0
    %v108 = vadd.f32 %v75, %v107
    %109 = vdwg.mxu0
    %110 = vmatpush.msra.mxu0 0.0
    %111 = vmatpush.msra.mxu0 0.0
    %112 = vmatpush.msra.mxu0 0.0
    %113 = vmatpush.msra.mxu0 0.0
    %114 = vmatpush.msra.mxu0 0.0
    %115 = vmatpush.msra.mxu0 0.0
    %116 = vmatpush.msra.mxu0 0.0
    %117 = vmatpush.msra.mxu0 0.0
    %118 = vmatpush.msra.mxu0 0.0
    %119 = vmatpush.msra.mxu0 0.0
    %120 = vmatpush.msra.mxu0 0.0
    %121 = vmatpush.msra.mxu0 0.0
    %v122 = vand.u32 %v72, 4294901760
    %v123 = vsub.f32 %v72, %v122
    %v124 = vand.u32 %v123, 4294901760
    %v125 = vsub.f32 %v123, %v124
    %v126 = vand.u32 %v125, 4294901760
    %127 = vmatpush.msra.mxu0 %v126
    %v128 = vand.u32 %v71, 4294901760
    %v129 = vsub.f32 %v71, %v128
    %v130 = vand.u32 %v129, 4294901760
    %v131 = vsub.f32 %v129, %v130
    %v132 = vand.u32 %v131, 4294901760
    %133 = vmatpush.msra.mxu0 %v132
    %v134 = vand.u32 %v70, 4294901760
    %v135 = vsub.f32 %v70, %v134
    %v136 = vand.u32 %v135, 4294901760
    %v137 = vsub.f32 %v135, %v136
    %v138 = vand.u32 %v137, 4294901760
    %139 = vmatpush.msra.mxu0 %v138
    %v140 = vand.u32 %v69, 4294901760
    %v141 = vsub.f32 %v69, %v140
    %v142 = vand.u32 %v141, 4294901760
    %v143 = vsub.f32 %v141, %v142
    %v144 = vand.u32 %v143, 4294901760
    %145 = vmatpush.msra.mxu0 %v144
    %v146 = vand.u32 %v79, 4294901760
    %147 = vmatmul.f32.gmra.mxu0 %v146
    %v148 = vpop.f32.mrf.mxu0
    %v149 = vadd.f32 %v108, %v148
    %150 = vdwg.mxu0
    %151 = vmatpush.msra.mxu0 0.0
    %152 = vmatpush.msra.mxu0 0.0
    %153 = vmatpush.msra.mxu0 0.0
    %154 = vmatpush.msra.mxu0 0.0
    %155 = vmatpush.msra.mxu0 0.0
    %156 = vmatpush.msra.mxu0 0.0
    %157 = vmatpush.msra.mxu0 0.0
    %158 = vmatpush.msra.mxu0 0.0
    %159 = vmatpush.msra.mxu0 0.0
    %160 = vmatpush.msra.mxu0 0.0
    %161 = vmatpush.msra.mxu0 0.0
    %162 = vmatpush.msra.mxu0 0.0
    %v163 = vand.u32 %v72, 4294901760
    %v164 = vsub.f32 %v72, %v163
    %165 = vmatpush.msra.mxu0 %v164
    %v166 = vand.u32 %v71, 4294901760
    %v167 = vsub.f32 %v71, %v166
    %168 = vmatpush.msra.mxu0 %v167
    %v169 = vand.u32 %v70, 4294901760
    %v170 = vsub.f32 %v70, %v169
    %171 = vmatpush.msra.mxu0 %v170
    %v172 = vand.u32 %v69, 4294901760
    %v173 = vsub.f32 %v69, %v172
    %174 = vmatpush.msra.mxu0 %v173
    %v175 = vand.u32 %v79, 4294901760
    %v176 = vsub.f32 %v79, %v175
    %177 = vmatmul.f32.gmra.mxu0 %v176
    %v178 = vpop.f32.mrf.mxu0
    %v179 = vadd.f32 %v149, %v178
    %180 = vdwg.mxu0
    %181 = vmatpush.msra.mxu0 0.0
    %182 = vmatpush.msra.mxu0 0.0
    %183 = vmatpush.msra.mxu0 0.0
    %184 = vmatpush.msra.mxu0 0.0
    %185 = vmatpush.msra.mxu0 0.0
    %186 = vmatpush.msra.mxu0 0.0
    %187 = vmatpush.msra.mxu0 0.0
    %188 = vmatpush.msra.mxu0 0.0
    %189 = vmatpush.msra.mxu0 0.0
    %190 = vmatpush.msra.mxu0 0.0
    %191 = vmatpush.msra.mxu0 0.0
    %192 = vmatpush.msra.mxu0 0.0
    %v193 = vand.u32 %v72, 4294901760
    %194 = vmatpush.msra.mxu0 %v193
    %v195 = vand.u32 %v71, 4294901760
    %196 = vmatpush.msra.mxu0 %v195
    %v197 = vand.u32 %v70, 4294901760
    %198 = vmatpush.msra.mxu0 %v197
    %v199 = vand.u32 %v69, 4294901760
    %200 = vmatpush.msra.mxu0 %v199
    %v201 = vand.u32 %v79, 4294901760
    %v202 = vsub.f32 %v79, %v201
    %v203 = vand.u32 %v202, 4294901760
    %204 = vmatmul.f32.gmra.mxu0 %v203
    %v205 = vpop.f32.mrf.mxu0
    %v206 = vadd.f32 %v179, %v205
    %207 = vdwg.mxu0
    %208 = vmatpush.msra.mxu0 0.0
    %209 = vmatpush.msra.mxu0 0.0
    %210 = vmatpush.msra.mxu0 0.0
    %211 = vmatpush.msra.mxu0 0.0
    %212 = vmatpush.msra.mxu0 0.0
    %213 = vmatpush.msra.mxu0 0.0
    %214 = vmatpush.msra.mxu0 0.0
    %215 = vmatpush.msra.mxu0 0.0
    %216 = vmatpush.msra.mxu0 0.0
    %217 = vmatpush.msra.mxu0 0.0
    %218 = vmatpush.msra.mxu0 0.0
    %219 = vmatpush.msra.mxu0 0.0
    %v220 = vand.u32 %v72, 4294901760
    %v221 = vsub.f32 %v72, %v220
    %v222 = vand.u32 %v221, 4294901760
    %223 = vmatpush.msra.mxu0 %v222
    %v224 = vand.u32 %v71, 4294901760
    %v225 = vsub.f32 %v71, %v224
    %v226 = vand.u32 %v225, 4294901760
    %227 = vmatpush.msra.mxu0 %v226
    %v228 = vand.u32 %v70, 4294901760
    %v229 = vsub.f32 %v70, %v228
    %v230 = vand.u32 %v229, 4294901760
    %231 = vmatpush.msra.mxu0 %v230
    %v232 = vand.u32 %v69, 4294901760
    %v233 = vsub.f32 %v69, %v232
    %v234 = vand.u32 %v233, 4294901760
    %235 = vmatpush.msra.mxu0 %v234
    %v236 = vand.u32 %v79, 4294901760
    %237 = vmatmul.f32.gmra.mxu0 %v236
    %v238 = vpop.f32.mrf.mxu0
    %v239 = vadd.f32 %v206, %v238
    %240 = vdwg.mxu0
    %241 = vmatpush.msra.mxu0 0.0
    %242 = vmatpush.msra.mxu0 0.0
    %243 = vmatpush.msra.mxu0 0.0
    %244 = vmatpush.msra.mxu0 0.0
    %245 = vmatpush.msra.mxu0 0.0
    %246 = vmatpush.msra.mxu0 0.0
    %247 = vmatpush.msra.mxu0 0.0
    %248 = vmatpush.msra.mxu0 0.0
    %249 = vmatpush.msra.mxu0 0.0
    %250 = vmatpush.msra.mxu0 0.0
    %251 = vmatpush.msra.mxu0 0.0
    %252 = vmatpush.msra.mxu0 0.0
    %v253 = vand.u32 %v72, 4294901760
    %254 = vmatpush.msra.mxu0 %v253
    %v255 = vand.u32 %v71, 4294901760
    %256 = vmatpush.msra.mxu0 %v255
    %v257 = vand.u32 %v70, 4294901760
    %258 = vmatpush.msra.mxu0 %v257
    %v259 = vand.u32 %v69, 4294901760
    %260 = vmatpush.msra.mxu0 %v259
    %v261 = vand.u32 %v79, 4294901760
    %262 = vmatmul.f32.gmra.mxu0 %v261
    %v263 = vpop.f32.mrf.mxu0
    %v264 = vadd.f32 %v239, %v263
    %265 = vdwg.mxu0
    %v267 = vsel %vm77, %v264, 0
    %269 = vmatpush.xpose.msra.mxu0 0.0
    %270 = vmatpush.xpose.msra.mxu0 0.0
    %271 = vmatpush.xpose.msra.mxu0 0.0
    %272 = vmatpush.xpose.msra.mxu0 0.0
    %273 = vmatpush.xpose.msra.mxu0 0.0
    %274 = vmatpush.xpose.msra.mxu0 0.0
    %275 = vmatpush.xpose.msra.mxu0 0.0
    %276 = vmatpush.xpose.msra.mxu0 0.0
    %277 = vmatpush.xpose.msra.mxu0 0.0
    %278 = vmatpush.xpose.msra.mxu0 0.0
    %279 = vmatpush.xpose.msra.mxu0 0.0
    %280 = vmatpush.xpose.msra.mxu0 0.0
    %281 = vmatpush.xpose.msra.mxu0 0.0
    %282 = vmatpush.xpose.msra.mxu0 0.0
    %283 = vmatpush.xpose.msra.mxu0 0.0
    %v284 = vand.u32 %v267, 4294901760
    %285 = vmatpush.xpose.msra.mxu0 %v284
    %v286 = vand.u32 %v79, 4294901760
    %v287 = vsub.f32 %v79, %v286
    %v288 = vand.u32 %v287, 4294901760
    %v289 = vsub.f32 %v287, %v288
    %v290 = vand.u32 %v289, 4294901760
    %291 = vmatmul.f32.gmra.mxu0 %v290
    %v292 = vpop.f32.mrf.mxu0
    %v293 = vadd.f32 0.0, %v292
    %294 = vdwg.mxu0
    %295 = vmatpush.xpose.msra.mxu0 0.0
    %296 = vmatpush.xpose.msra.mxu0 0.0
    %297 = vmatpush.xpose.msra.mxu0 0.0
    %298 = vmatpush.xpose.msra.mxu0 0.0
    %299 = vmatpush.xpose.msra.mxu0 0.0
    %300 = vmatpush.xpose.msra.mxu0 0.0
    %301 = vmatpush.xpose.msra.mxu0 0.0
    %302 = vmatpush.xpose.msra.mxu0 0.0
    %303 = vmatpush.xpose.msra.mxu0 0.0
    %304 = vmatpush.xpose.msra.mxu0 0.0
    %305 = vmatpush.xpose.msra.mxu0 0.0
    %306 = vmatpush.xpose.msra.mxu0 0.0
    %307 = vmatpush.xpose.msra.mxu0 0.0
    %308 = vmatpush.xpose.msra.mxu0 0.0
    %309 = vmatpush.xpose.msra.mxu0 0.0
    %v310 = vand.u32 %v267, 4294901760
    %v311 = vsub.f32 %v267, %v310
    %v312 = vand.u32 %v311, 4294901760
    %v313 = vsub.f32 %v311, %v312
    %v314 = vand.u32 %v313, 4294901760
    %315 = vmatpush.xpose.msra.mxu0 %v314
    %v316 = vand.u32 %v79, 4294901760
    %317 = vmatmul.f32.gmra.mxu0 %v316
    %v318 = vpop.f32.mrf.mxu0
    %v319 = vadd.f32 %v293, %v318
    %320 = vdwg.mxu0
    %321 = vmatpush.xpose.msra.mxu0 0.0
    %322 = vmatpush.xpose.msra.mxu0 0.0
    %323 = vmatpush.xpose.msra.mxu0 0.0
    %324 = vmatpush.xpose.msra.mxu0 0.0
    %325 = vmatpush.xpose.msra.mxu0 0.0
    %326 = vmatpush.xpose.msra.mxu0 0.0
    %327 = vmatpush.xpose.msra.mxu0 0.0
    %328 = vmatpush.xpose.msra.mxu0 0.0
    %329 = vmatpush.xpose.msra.mxu0 0.0
    %330 = vmatpush.xpose.msra.mxu0 0.0
    %331 = vmatpush.xpose.msra.mxu0 0.0
    %332 = vmatpush.xpose.msra.mxu0 0.0
    %333 = vmatpush.xpose.msra.mxu0 0.0
    %334 = vmatpush.xpose.msra.mxu0 0.0
    %335 = vmatpush.xpose.msra.mxu0 0.0
    %v336 = vand.u32 %v267, 4294901760
    %v337 = vsub.f32 %v267, %v336
    %338 = vmatpush.xpose.msra.mxu0 %v337
    %v339 = vand.u32 %v79, 4294901760
    %v340 = vsub.f32 %v79, %v339
    %341 = vmatmul.f32.gmra.mxu0 %v340
    %v342 = vpop.f32.mrf.mxu0
    %v343 = vadd.f32 %v319, %v342
    %344 = vdwg.mxu0
    %345 = vmatpush.xpose.msra.mxu0 0.0
    %346 = vmatpush.xpose.msra.mxu0 0.0
    %347 = vmatpush.xpose.msra.mxu0 0.0
    %348 = vmatpush.xpose.msra.mxu0 0.0
    %349 = vmatpush.xpose.msra.mxu0 0.0
    %350 = vmatpush.xpose.msra.mxu0 0.0
    %351 = vmatpush.xpose.msra.mxu0 0.0
    %352 = vmatpush.xpose.msra.mxu0 0.0
    %353 = vmatpush.xpose.msra.mxu0 0.0
    %354 = vmatpush.xpose.msra.mxu0 0.0
    %355 = vmatpush.xpose.msra.mxu0 0.0
    %356 = vmatpush.xpose.msra.mxu0 0.0
    %357 = vmatpush.xpose.msra.mxu0 0.0
    %358 = vmatpush.xpose.msra.mxu0 0.0
    %359 = vmatpush.xpose.msra.mxu0 0.0
    %v360 = vand.u32 %v267, 4294901760
    %361 = vmatpush.xpose.msra.mxu0 %v360
    %v362 = vand.u32 %v79, 4294901760
    %v363 = vsub.f32 %v79, %v362
    %v364 = vand.u32 %v363, 4294901760
    %365 = vmatmul.f32.gmra.mxu0 %v364
    %v366 = vpop.f32.mrf.mxu0
    %v367 = vadd.f32 %v343, %v366
    %368 = vdwg.mxu0
    %369 = vmatpush.xpose.msra.mxu0 0.0
    %370 = vmatpush.xpose.msra.mxu0 0.0
    %371 = vmatpush.xpose.msra.mxu0 0.0
    %372 = vmatpush.xpose.msra.mxu0 0.0
    %373 = vmatpush.xpose.msra.mxu0 0.0
    %374 = vmatpush.xpose.msra.mxu0 0.0
    %375 = vmatpush.xpose.msra.mxu0 0.0
    %376 = vmatpush.xpose.msra.mxu0 0.0
    %377 = vmatpush.xpose.msra.mxu0 0.0
    %378 = vmatpush.xpose.msra.mxu0 0.0
    %379 = vmatpush.xpose.msra.mxu0 0.0
    %380 = vmatpush.xpose.msra.mxu0 0.0
    %381 = vmatpush.xpose.msra.mxu0 0.0
    %382 = vmatpush.xpose.msra.mxu0 0.0
    %383 = vmatpush.xpose.msra.mxu0 0.0
    %v384 = vand.u32 %v267, 4294901760
    %v385 = vsub.f32 %v267, %v384
    %v386 = vand.u32 %v385, 4294901760
    %387 = vmatpush.xpose.msra.mxu0 %v386
    %v388 = vand.u32 %v79, 4294901760
    %389 = vmatmul.f32.gmra.mxu0 %v388
    %v390 = vpop.f32.mrf.mxu0
    %v391 = vadd.f32 %v367, %v390
    %392 = vdwg.mxu0
    %393 = vmatpush.xpose.msra.mxu0 0.0
    %394 = vmatpush.xpose.msra.mxu0 0.0
    %395 = vmatpush.xpose.msra.mxu0 0.0
    %396 = vmatpush.xpose.msra.mxu0 0.0
    %397 = vmatpush.xpose.msra.mxu0 0.0
    %398 = vmatpush.xpose.msra.mxu0 0.0
    %399 = vmatpush.xpose.msra.mxu0 0.0
    %400 = vmatpush.xpose.msra.mxu0 0.0
    %401 = vmatpush.xpose.msra.mxu0 0.0
    %402 = vmatpush.xpose.msra.mxu0 0.0
    %403 = vmatpush.xpose.msra.mxu0 0.0
    %404 = vmatpush.xpose.msra.mxu0 0.0
    %405 = vmatpush.xpose.msra.mxu0 0.0
    %406 = vmatpush.xpose.msra.mxu0 0.0
    %407 = vmatpush.xpose.msra.mxu0 0.0
    %v408 = vand.u32 %v267, 4294901760
    %409 = vmatpush.xpose.msra.mxu0 %v408
    %v410 = vand.u32 %v79, 4294901760
    %411 = vmatmul.f32.gmra.mxu0 %v410
    %v412 = vpop.f32.mrf.mxu0
    %v413 = vadd.f32 %v391, %v412
    %414 = vdwg.mxu0
    %vm415 = vcmask 64512
    %v416 = vsel %vm415, %v413, -inf
    %417 = vmax.xlane.f32.xlu0 %v416
    %v418 = vpop.xlane.xlu0 %417
    %v419 = vsub.f32 %v413, %v418
    %v420 = vmul.f32 %v419, 1.442695
    %v421 = vpow.pop %v420
    %v422 = vsel %vm415, %v421, 0.0
    %423 = vadd.xlane.f32.xlu0 %v422
    %v424 = vpop.xlane.xlu0 %423
    %v425 = vrcp.pop %v424
    %v426 = vmul.f32 %v424, %v425
    %v427 = vsub.f32 1.0, %v426
    %v428 = vmul.f32 %v425, %v427
    %v429 = vadd.f32 %v425, %v428
    %vm430 = vweird.f32 %v424
    %vm431 = vweird.f32 %v425
    %vm432 = vmor %vm430, %vm431
    %v433 = vsel %vm432, %v425, %v429
    %v434 = vand.u32 2147483647, %v424
    %vm435 = vcmp.eq.f32.partialorder %v434, 8.507059e+37
    %v436 = vand.u32 %v424, 2147483648
    %v437 = vor.u32 1.1754944e-38, %v436
    %v438 = vsel %vm435, %v437, %v433
    %v439 = vmul.f32 %v421, %v438
    %v441 = vsel %vm415, %v439, 0
    %443 = vmatpush.msra.mxu0 0.0
    %444 = vmatpush.msra.mxu0 0.0
    %445 = vmatpush.msra.mxu0 0.0
    %446 = vmatpush.msra.mxu0 0.0
    %447 = vmatpush.msra.mxu0 0.0
    %448 = vmatpush.msra.mxu0 0.0
    %449 = vmatpush.msra.mxu0 0.0
    %450 = vmatpush.msra.mxu0 0.0
    %451 = vmatpush.msra.mxu0 0.0
    %452 = vmatpush.msra.mxu0 0.0
    %453 = vmatpush.msra.mxu0 0.0
    %454 = vmatpush.msra.mxu0 0.0
    %455 = vmatpush.msra.mxu0 0.0
    %456 = vmatpush.msra.mxu0 0.0
    %457 = vmatpush.msra.mxu0 0.0
    %v458 = vand.u32 %v68, 4294901760
    %459 = vmatpush.msra.mxu0 %v458
    %v460 = vand.u32 %v441, 4294901760
    %v461 = vsub.f32 %v441, %v460
    %v462 = vand.u32 %v461, 4294901760
    %v463 = vsub.f32 %v461, %v462
    %v464 = vand.u32 %v463, 4294901760
    %465 = vmatmul.f32.gmra.mxu0 %v464
    %v466 = vpop.f32.mrf.mxu0
    %v467 = vadd.f32 0.0, %v466
    %468 = vdwg.mxu0
    %469 = vmatpush.msra.mxu0 0.0
    %470 = vmatpush.msra.mxu0 0.0
    %471 = vmatpush.msra.mxu0 0.0
    %472 = vmatpush.msra.mxu0 0.0
    %473 = vmatpush.msra.mxu0 0.0
    %474 = vmatpush.msra.mxu0 0.0
    %475 = vmatpush.msra.mxu0 0.0
    %476 = vmatpush.msra.mxu0 0.0
    %477 = vmatpush.msra.mxu0 0.0
    %478 = vmatpush.msra.mxu0 0.0
    %479 = vmatpush.msra.mxu0 0.0
    %480 = vmatpush.msra.mxu0 0.0
    %481 = vmatpush.msra.mxu0 0.0
    %482 = vmatpush.msra.mxu0 0.0
    %483 = vmatpush.msra.mxu0 0.0
    %v484 = vand.u32 %v68, 4294901760
    %v485 = vsub.f32 %v68, %v484
    %v486 = vand.u32 %v485, 4294901760
    %v487 = vsub.f32 %v485, %v486
    %v488 = vand.u32 %v487, 4294901760
    %489 = vmatpush.msra.mxu0 %v488
    %v490 = vand.u32 %v441, 4294901760
    %491 = vmatmul.f32.gmra.mxu0 %v490
    %v492 = vpop.f32.mrf.mxu0
    %v493 = vadd.f32 %v467, %v492
    %494 = vdwg.mxu0
    %495 = vmatpush.msra.mxu0 0.0
    %496 = vmatpush.msra.mxu0 0.0
    %497 = vmatpush.msra.mxu0 0.0
    %498 = vmatpush.msra.mxu0 0.0
    %499 = vmatpush.msra.mxu0 0.0
    %500 = vmatpush.msra.mxu0 0.0
    %501 = vmatpush.msra.mxu0 0.0
    %502 = vmatpush.msra.mxu0 0.0
    %503 = vmatpush.msra.mxu0 0.0
    %504 = vmatpush.msra.mxu0 0.0
    %505 = vmatpush.msra.mxu0 0.0
    %506 = vmatpush.msra.mxu0 0.0
    %507 = vmatpush.msra.mxu0 0.0
    %508 = vmatpush.msra.mxu0 0.0
    %509 = vmatpush.msra.mxu0 0.0
    %v510 = vand.u32 %v68, 4294901760
    %v511 = vsub.f32 %v68, %v510
    %512 = vmatpush.msra.mxu0 %v511
    %v513 = vand.u32 %v441, 4294901760
    %v514 = vsub.f32 %v441, %v513
    %515 = vmatmul.f32.gmra.mxu0 %v514
    %v516 = vpop.f32.mrf.mxu0
    %v517 = vadd.f32 %v493, %v516
    %518 = vdwg.mxu0
    %519 = vmatpush.msra.mxu0 0.0
    %520 = vmatpush.msra.mxu0 0.0
    %521 = vmatpush.msra.mxu0 0.0
    %522 = vmatpush.msra.mxu0 0.0
    %523 = vmatpush.msra.mxu0 0.0
    %524 = vmatpush.msra.mxu0 0.0
    %525 = vmatpush.msra.mxu0 0.0
    %526 = vmatpush.msra.mxu0 0.0
    %527 = vmatpush.msra.mxu0 0.0
    %528 = vmatpush.msra.mxu0 0.0
    %529 = vmatpush.msra.mxu0 0.0
    %530 = vmatpush.msra.mxu0 0.0
    %531 = vmatpush.msra.mxu0 0.0
    %532 = vmatpush.msra.mxu0 0.0
    %533 = vmatpush.msra.mxu0 0.0
    %v534 = vand.u32 %v68, 4294901760
    %535 = vmatpush.msra.mxu0 %v534
    %v536 = vand.u32 %v441, 4294901760
    %v537 = vsub.f32 %v441, %v536
    %v538 = vand.u32 %v537, 4294901760
    %539 = vmatmul.f32.gmra.mxu0 %v538
    %v540 = vpop.f32.mrf.mxu0
    %v541 = vadd.f32 %v517, %v540
    %542 = vdwg.mxu0
    %543 = vmatpush.msra.mxu0 0.0
    %544 = vmatpush.msra.mxu0 0.0
    %545 = vmatpush.msra.mxu0 0.0
    %546 = vmatpush.msra.mxu0 0.0
    %547 = vmatpush.msra.mxu0 0.0
    %548 = vmatpush.msra.mxu0 0.0
    %549 = vmatpush.msra.mxu0 0.0
    %550 = vmatpush.msra.mxu0 0.0
    %551 = vmatpush.msra.mxu0 0.0
    %552 = vmatpush.msra.mxu0 0.0
    %553 = vmatpush.msra.mxu0 0.0
    %554 = vmatpush.msra.mxu0 0.0
    %555 = vmatpush.msra.mxu0 0.0
    %556 = vmatpush.msra.mxu0 0.0
    %557 = vmatpush.msra.mxu0 0.0
    %v558 = vand.u32 %v68, 4294901760
    %v559 = vsub.f32 %v68, %v558
    %v560 = vand.u32 %v559, 4294901760
    %561 = vmatpush.msra.mxu0 %v560
    %v562 = vand.u32 %v441, 4294901760
    %563 = vmatmul.f32.gmra.mxu0 %v562
    %v564 = vpop.f32.mrf.mxu0
    %v565 = vadd.f32 %v541, %v564
    %566 = vdwg.mxu0
    %567 = vmatpush.msra.mxu0 0.0
    %568 = vmatpush.msra.mxu0 0.0
    %569 = vmatpush.msra.mxu0 0.0
    %570 = vmatpush.msra.mxu0 0.0
    %571 = vmatpush.msra.mxu0 0.0
    %572 = vmatpush.msra.mxu0 0.0
    %573 = vmatpush.msra.mxu0 0.0
    %574 = vmatpush.msra.mxu0 0.0
    %575 = vmatpush.msra.mxu0 0.0
    %576 = vmatpush.msra.mxu0 0.0
    %577 = vmatpush.msra.mxu0 0.0
    %578 = vmatpush.msra.mxu0 0.0
    %579 = vmatpush.msra.mxu0 0.0
    %580 = vmatpush.msra.mxu0 0.0
    %581 = vmatpush.msra.mxu0 0.0
    %v582 = vand.u32 %v68, 4294901760
    %583 = vmatpush.msra.mxu0 %v582
    %v584 = vand.u32 %v441, 4294901760
    %585 = vmatmul.f32.gmra.mxu0 %v584
    %v586 = vpop.f32.mrf.mxu0
    %v587 = vadd.f32 %v565, %v586
    %588 = vdwg.mxu0
    %589 = vst.msk [vmem:[#allocation8] sm:$0xff] %vm77, %v587
    // Predicated region
    $region30: #{tpu_custom_call.1} parent=1 // pred_check
      _
    $region31: #{tpu_custom_call.1} parent=1 // pred_check_branch
      %591 = sbr.rel (0) target = $region33
    $region32: #{tpu_custom_call.1} parent=1 // pred_region
      %593 = vsyncadd [#allocation4], 0
      %s595 = sshll.u32 [#allocation8], 4
      %s596 = int_to_ptr.vmem [resolvable:$true] %s595
      %s597 = sshll.u32 %s4, 4
      %s598 = int_to_ptr.hbm [resolvable:$true] %s597
      %600 = dma.vmem_to_hbm [thread:$0]  %s596, 128, %s598, [#allocation4]
    $region33: #{tpu_custom_call.1} parent=1 // pred_fallthru
      _
    // Predicated region
    $region34: #{tpu_custom_call.1} parent=1 // pred_check
      _
    $region35: #{tpu_custom_call.1} parent=1 // pred_check_branch
      %602 = sbr.rel (0) target = $region37
    $region36: #{tpu_custom_call.1} parent=1 // pred_region
      %604 = dma.done [#allocation4], 128
    $region37: #{tpu_custom_call.1} parent=1 // pred_fallthru
      _
    %605 = vsyncpa [#allocation3], 1
    %606 = vsyncpa [#allocation6], 1
    %607 = vsyncpa [#allocation4], 1

</llo_original>
